<compile_context>
chip_gen: v7x
topology: tpu7x:2x2x1
jax: 0.10.0
libtpu: 0.0.40
codegen_flags: <defaults>
</compile_context>

<pallas_src>
import functools

import jax
import jax.numpy as jnp
from jax.experimental import pallas as pl
from jax.experimental.pallas import tpu as pltpu


def _adapter_kernel(x_ref, wd_ref, bd_ref, wu_ref, bu_ref, o_ref, *,
                    compute_dtype):
    # x_ref:  (block_m, Hp)   activations tile (input dtype)
    # wd_ref: (Hp, Bp)        down-projection weight (compute_dtype)
    # bd_ref: (1, Bp)         down-projection bias (f32)
    # wu_ref: (Bp, Hp)        up-projection weight (compute_dtype)
    # bu_ref: (1, Hp)         up-projection bias (f32)
    # o_ref:  (block_m, Hp)   output tile (input dtype)
    x = x_ref[...].astype(compute_dtype)

    # down_project (MXU), f32 accumulation.
    h = jnp.dot(x, wd_ref[...], preferred_element_type=jnp.float32)
    # bias + ReLU on the VPU — free filler under the MXU/DMA-bound loop.
    h = jnp.maximum(h + bd_ref[...], 0.0)

    # up_project (MXU), f32 accumulation.
    y = jnp.dot(h.astype(compute_dtype), wu_ref[...],
                preferred_element_type=jnp.float32)
    y = y + bu_ref[...]

    o_ref[...] = y.astype(o_ref.dtype)


def _round_up(a, b):
    return ((a + b - 1) // b) * b


def _pad_axis(a, axis, target):
    pad = target - a.shape[axis]
    if pad == 0:
        return a
    widths = [(0, 0)] * a.ndim
    widths[axis] = (0, pad)
    return jnp.pad(a, widths)


def _physical_vmem_bytes():
    try:
        return int(pltpu.get_tpu_info().vmem_capacity_bytes)
    except Exception:
        return 64 << 20  # conservative fallback (v7x per-TC)


def task_adapter(x, w_down, b_down, w_up, b_up, *, block_m=None,
                 use_bf16_matmul=True):
    """x: (..., hidden). Returns up(relu(down(x))), same shape/dtype as x.

    w_down: (hidden, bottleneck), w_up: (bottleneck, hidden)  (transposed vs
    PyTorch nn.Linear so the kernel does plain row-major matmuls).
    """
    orig_shape = x.shape
    hidden = orig_shape[-1]
    bottleneck = w_down.shape[1]
    x2d = x.reshape(-1, hidden)
    m = x2d.shape[0]

    # Lane-density guard: keep both feature dims a multiple of 128 so the
    # matmuls and the output store are lane-dense (no masked partial stores).
    hidden_p = max(_round_up(hidden, 128), 128)
    bottleneck_p = max(_round_up(bottleneck, 128), 128)

    compute_dtype = jnp.bfloat16 if use_bf16_matmul else x2d.dtype
    act_bytes = jnp.dtype(x2d.dtype).itemsize
    w_bytes = jnp.dtype(compute_dtype).itemsize
    cast = jnp.dtype(compute_dtype) != jnp.dtype(x2d.dtype)

    # Zero-pad features in the wrapper (no-op for 768/1024/4096-style hidden).
    x2d_p = _pad_axis(x2d, 1, hidden_p)
    wd = _pad_axis(_pad_axis(w_down, 0, hidden_p), 1,
                   bottleneck_p).astype(compute_dtype)
    wu = _pad_axis(_pad_axis(w_up, 0, bottleneck_p), 1,
                   hidden_p).astype(compute_dtype)
    bd2d = _pad_axis(b_down.reshape(1, bottleneck), 1,
                     bottleneck_p).astype(jnp.float32)
    bu2d = _pad_axis(b_up.reshape(1, hidden), 1, hidden_p).astype(jnp.float32)

    def vmem_estimate(bm):
        # x + out tiles, double-buffered by the pipeline.
        acts = 2 * bm * hidden_p * act_bytes * 2
        # Weights single-buffered (constant index_map + pl.Buffered(1)).
        wts = 2 * hidden_p * bottleneck_p * w_bytes
        biases = 4 * (hidden_p + bottleneck_p)
        # Kernel temporaries: f32 h, f32 pre-cast y, bf16 copies of x and h.
        tmp = bm * bottleneck_p * 4 + bm * hidden_p * 4
        if cast:
            tmp += bm * hidden_p * w_bytes + bm * bottleneck_p * w_bytes
        return acts + wts + biases + tmp + (1 << 16)

    # Generation-aware budget: use the physical VMEM of this chip (128 MiB on
    # v5e/v6e, 64 MiB/TC on v7x) minus headroom, instead of a one-size cap.
    vmem_phys = _physical_vmem_bytes()
    vmem_cap = min(vmem_phys - (8 << 20), 100 << 20)
    margin = 5 << 20
    budget = vmem_cap - margin

    if block_m is None:
        block_m = 8
        for cand in (1024, 512, 256, 128, 64, 32, 16, 8):
            if vmem_estimate(cand) <= budget:
                block_m = cand
                break
        # Don't over-tile tiny inputs (the ragged last tile is masked anyway).
        block_m = min(block_m, max(8, _round_up(m, 8)))

    grid = (pl.cdiv(m, block_m),)
    vmem_limit = int(min(vmem_estimate(block_m) + margin, vmem_cap))

    cost = pl.CostEstimate(
        flops=4 * m * hidden_p * bottleneck_p,
        transcendentals=0,
        bytes_accessed=(2 * m * hidden_p * act_bytes
                        + 2 * hidden_p * bottleneck_p * w_bytes
                        + 4 * (hidden_p + bottleneck_p)),
    )

    kernel = functools.partial(_adapter_kernel, compute_dtype=compute_dtype)

    def _build_and_call(single_buffer_resident):
        # Weights/biases never change block index -> single-buffer them and
        # spend the reclaimed VMEM on larger row tiles.
        if single_buffer_resident:
            resident = dict(pipeline_mode=pl.Buffered(1))
        else:
            resident = {}
        return pl.pallas_call(
            kernel,
            out_shape=jax.ShapeDtypeStruct((m, hidden_p), x2d.dtype),
            grid_spec=pltpu.PrefetchScalarGridSpec(
                num_scalar_prefetch=0,
                grid=grid,
                in_specs=[
                    pl.BlockSpec((block_m, hidden_p), lambda i: (i, 0)),
                    pl.BlockSpec((hidden_p, bottleneck_p), lambda i: (0, 0),
                                 **resident),
                    pl.BlockSpec((1, bottleneck_p), lambda i: (0, 0),
                                 **resident),
                    pl.BlockSpec((bottleneck_p, hidden_p), lambda i: (0, 0),
                                 **resident),
                    pl.BlockSpec((1, hidden_p), lambda i: (0, 0),
                                 **resident),
                ],
                out_specs=pl.BlockSpec((block_m, hidden_p), lambda i: (i, 0)),
            ),
            compiler_params=pltpu.CompilerParams(
                dimension_semantics=("parallel",),
                vmem_limit_bytes=vmem_limit),
            cost_estimate=cost,
        )(x2d_p, wd, bd2d, wu, bu2d)

    try:
        out = _build_and_call(True)
    except Exception:
        # TODO(synk): drop this fallback once Buffered(1) resident operands
        # are guaranteed by the deployed jax version.
        out = _build_and_call(False)

    if hidden_p != hidden:
        out = out[:, :hidden]
    return out.reshape(orig_shape)


def init_params(key, hidden_size, bottleneck_dim=128, dtype=jnp.float32):
    """nn.Linear-style init (uniform +/- 1/sqrt(fan_in)), weights stored
    transposed relative to PyTorch: w_down (hidden, bottleneck),
    w_up (bottleneck, hidden)."""
    k1, k2, k3, k4 = jax.random.split(key, 4)
    bound_d = 1.0 / jnp.sqrt(hidden_size)
    bound_u = 1.0 / jnp.sqrt(bottleneck_dim)
    w_down = jax.random.uniform(k1, (hidden_size, bottleneck_dim), dtype,
                                minval=-bound_d, maxval=bound_d)
    b_down = jax.random.uniform(k2, (bottleneck_dim,), dtype,
                                minval=-bound_d, maxval=bound_d)
    w_up = jax.random.uniform(k3, (bottleneck_dim, hidden_size), dtype,
                              minval=-bound_u, maxval=bound_u)
    b_up = jax.random.uniform(k4, (hidden_size,), dtype,
                              minval=-bound_u, maxval=bound_u)
    return w_down, b_down, w_up, b_up


def _ref_adapter(x, w_down, b_down, w_up, b_up):
    return jnp.maximum(x @ w_down + b_down, 0.0) @ w_up + b_up


if __name__ == "__main__":
    key = jax.random.PRNGKey(0)
    kx, kp, kq = jax.random.split(key, 3)

    # --- Toy shape from the module spec (hidden=32 < 128 exercises the
    #     lane-padding path). ---
    batch, seq, hidden = 2, 8, 32
    bottleneck = 128
    x = jax.random.normal(kx, (batch, seq, hidden), dtype=jnp.float32)
    w_down, b_down, w_up, b_up = init_params(kp, hidden, bottleneck)
    ref = _ref_adapter(x, w_down, b_down, w_up, b_up)

    # Full-precision path: exact match expected.
    out_f32 = task_adapter(x, w_down, b_down, w_up, b_up,
                           use_bf16_matmul=False)
    out_f32 = jax.block_until_ready(out_f32)
    assert out_f32.shape == x.shape
    assert jnp.allclose(out_f32, ref, atol=1e-5, rtol=1e-5), \
        "f32 kernel mismatch vs reference"

    # Default (bf16 matmul operands, f32 accumulation): small relative error.
    out = task_adapter(x, w_down, b_down, w_up, b_up)
    out = jax.block_until_ready(out)
    assert out.shape == x.shape
    assert jnp.allclose(out, ref, atol=2e-2, rtol=2e-2), \
        "bf16-matmul kernel mismatch vs reference"

    # --- Ragged-tile + padding check: hidden multiple of 128, bottleneck not,
    #     m not a multiple of block_m (exercises masked last tile). ---
    batch2, seq2, hidden2, bneck2 = 3, 50, 256, 96
    kx2, kp2 = jax.random.split(kq)
    x2 = jax.random.normal(kx2, (batch2, seq2, hidden2), dtype=jnp.float32)
    p2 = init_params(kp2, hidden2, bneck2)
    ref2 = _ref_adapter(x2, *p2)
    out2 = task_adapter(x2, *p2, block_m=64, use_bf16_matmul=False)
    out2 = jax.block_until_ready(out2)
    assert out2.shape == x2.shape
    assert jnp.allclose(out2, ref2, atol=1e-2, rtol=1e-2), \
        "ragged-tile kernel mismatch vs reference"

    print("KERNEL_OK")
</pallas_src>

<mosaic_0001>
module attributes {stable_mosaic.version = 11 : i64} {
  func.func @_adapter_kernel(%arg0: i32, %arg1: memref<16x128xf32, #tpu.memory_space<vmem>>, %arg2: memref<128x128xf32, #tpu.memory_space<vmem>>, %arg3: memref<1x128xf32, #tpu.memory_space<vmem>>, %arg4: memref<128x128xf32, #tpu.memory_space<vmem>>, %arg5: memref<1x128xf32, #tpu.memory_space<vmem>>, %arg6: memref<16x128xf32, #tpu.memory_space<vmem>>) attributes {dimension_semantics = [#tpu.dimension_semantics<parallel>], iteration_bounds = array<i64: 1>, scalar_prefetch = 0 : i64, scratch_operands = 0 : i64, tpu.core_type = #tpu.core_type<tc>, window_params = [{transform_indices = @transform_0, window_bounds = array<i64: 16, 128>}, {pipeline_mode = #tpu.pipeline_mode<synchronous>, transform_indices = @transform_1, window_bounds = array<i64: 128, 128>}, {pipeline_mode = #tpu.pipeline_mode<synchronous>, transform_indices = @transform_2, window_bounds = array<i64: 1, 128>}, {pipeline_mode = #tpu.pipeline_mode<synchronous>, transform_indices = @transform_3, window_bounds = array<i64: 128, 128>}, {pipeline_mode = #tpu.pipeline_mode<synchronous>, transform_indices = @transform_4, window_bounds = array<i64: 1, 128>}, {transform_indices = @transform_5, window_bounds = array<i64: 16, 128>}]} {
    %c0 = arith.constant 0 : index
    %c0_0 = arith.constant 0 : index
    %0 = vector.load %arg1[%c0, %c0_0] : memref<16x128xf32, #tpu.memory_space<vmem>>, vector<16x128xf32>
    %c0_1 = arith.constant 0 : index
    %c0_2 = arith.constant 0 : index
    %1 = vector.load %arg2[%c0_1, %c0_2] : memref<128x128xf32, #tpu.memory_space<vmem>>, vector<128x128xf32>
    %cst = arith.constant dense<0.000000e+00> : vector<16x128xf32>
    %2 = tpu.matmul %0, %1, %cst {dimension_numbers = #tpu.dot_dimension_numbers<[1], [0], [0], [1], [0, 0, 1, 1], [], []>} : vector<16x128xf32>, vector<128x128xf32>, vector<16x128xf32> -> vector<16x128xf32>
    %c0_3 = arith.constant 0 : index
    %c0_4 = arith.constant 0 : index
    %3 = vector.load %arg3[%c0_3, %c0_4] : memref<1x128xf32, #tpu.memory_space<vmem>>, vector<1x128xf32>
    %4 = vector.broadcast %3 : vector<1x128xf32> to vector<16x128xf32>
    %5 = arith.addf %2, %4 : vector<16x128xf32>
    %cst_5 = arith.constant 0.000000e+00 : f32
    %6 = vector.broadcast %cst_5 : f32 to vector<16x128xf32>
    %7 = arith.maximumf %5, %6 : vector<16x128xf32>
    %c0_6 = arith.constant 0 : index
    %c0_7 = arith.constant 0 : index
    %8 = vector.load %arg4[%c0_6, %c0_7] : memref<128x128xf32, #tpu.memory_space<vmem>>, vector<128x128xf32>
    %cst_8 = arith.constant dense<0.000000e+00> : vector<16x128xf32>
    %9 = tpu.matmul %7, %8, %cst_8 {dimension_numbers = #tpu.dot_dimension_numbers<[1], [0], [0], [1], [0, 0, 1, 1], [], []>} : vector<16x128xf32>, vector<128x128xf32>, vector<16x128xf32> -> vector<16x128xf32>
    %c0_9 = arith.constant 0 : index
    %c0_10 = arith.constant 0 : index
    %10 = vector.load %arg5[%c0_9, %c0_10] : memref<1x128xf32, #tpu.memory_space<vmem>>, vector<1x128xf32>
    %11 = vector.broadcast %10 : vector<1x128xf32> to vector<16x128xf32>
    %12 = arith.addf %9, %11 : vector<16x128xf32>
    %c0_11 = arith.constant 0 : index
    %c0_12 = arith.constant 0 : index
    %13 = vector.load %arg6[%c0_11, %c0_12] : memref<16x128xf32, #tpu.memory_space<vmem>>, vector<16x128xf32>
    tpu.vector_store %arg6[%c0_11, %c0_12], %12 {strides = array<i32>} : memref<16x128xf32, #tpu.memory_space<vmem>>, vector<16x128xf32>,
    return
  }
  func.func @transform_0(%arg0: i32) -> (i32, i32) {
    %c0_i32 = arith.constant 0 : i32
    %c0_i32_0 = arith.constant 0 : i32
    return %arg0, %c0_i32 : i32, i32
  }
  func.func @transform_1(%arg0: i32) -> (i32, i32) {
    %c0_i32 = arith.constant 0 : i32
    %c0_i32_0 = arith.constant 0 : i32
    %c0_i32_1 = arith.constant 0 : i32
    return %c0_i32, %c0_i32_0 : i32, i32
  }
  func.func @transform_2(%arg0: i32) -> (i32, i32) {
    %c0_i32 = arith.constant 0 : i32
    %c0_i32_0 = arith.constant 0 : i32
    %c0_i32_1 = arith.constant 0 : i32
    return %c0_i32, %c0_i32_0 : i32, i32
  }
  func.func @transform_3(%arg0: i32) -> (i32, i32) {
    %c0_i32 = arith.constant 0 : i32
    %c0_i32_0 = arith.constant 0 : i32
    %c0_i32_1 = arith.constant 0 : i32
    return %c0_i32, %c0_i32_0 : i32, i32
  }
  func.func @transform_4(%arg0: i32) -> (i32, i32) {
    %c0_i32 = arith.constant 0 : i32
    %c0_i32_0 = arith.constant 0 : i32
    %c0_i32_1 = arith.constant 0 : i32
    return %c0_i32, %c0_i32_0 : i32, i32
  }
  func.func @transform_5(%arg0: i32) -> (i32, i32) {
    %c0_i32 = arith.constant 0 : i32
    %c0_i32_0 = arith.constant 0 : i32
    return %arg0, %c0_i32 : i32, i32
  }
}

module attributes {stable_mosaic.version = 11 : i64} {
  func.func @_adapter_kernel(%arg0: i32, %arg1: memref<16x128xf32, #tpu.memory_space<vmem>>, %arg2: memref<128x128xf32, #tpu.memory_space<vmem>>, %arg3: memref<1x128xf32, #tpu.memory_space<vmem>>, %arg4: memref<128x128xf32, #tpu.memory_space<vmem>>, %arg5: memref<1x128xf32, #tpu.memory_space<vmem>>, %arg6: memref<16x128xf32, #tpu.memory_space<vmem>>) attributes {dimension_semantics = [#tpu.dimension_semantics<parallel>], iteration_bounds = array<i64: 1>, scalar_prefetch = 0 : i64, scratch_operands = 0 : i64, tpu.core_type = #tpu.core_type<tc>, window_params = [{transform_indices = @transform_0, window_bounds = array<i64: 16, 128>}, {pipeline_mode = #tpu.pipeline_mode<synchronous>, transform_indices = @transform_1, window_bounds = array<i64: 128, 128>}, {pipeline_mode = #tpu.pipeline_mode<synchronous>, transform_indices = @transform_2, window_bounds = array<i64: 1, 128>}, {pipeline_mode = #tpu.pipeline_mode<synchronous>, transform_indices = @transform_3, window_bounds = array<i64: 128, 128>}, {pipeline_mode = #tpu.pipeline_mode<synchronous>, transform_indices = @transform_4, window_bounds = array<i64: 1, 128>}, {transform_indices = @transform_5, window_bounds = array<i64: 16, 128>}]} {
    %c0 = arith.constant 0 : index
    %c0_0 = arith.constant 0 : index
    %0 = vector.load %arg1[%c0, %c0_0] : memref<16x128xf32, #tpu.memory_space<vmem>>, vector<16x128xf32>
    %c0_1 = arith.constant 0 : index
    %c0_2 = arith.constant 0 : index
    %1 = vector.load %arg2[%c0_1, %c0_2] : memref<128x128xf32, #tpu.memory_space<vmem>>, vector<128x128xf32>
    %cst = arith.constant dense<0.000000e+00> : vector<16x128xf32>
    %2 = tpu.matmul %0, %1, %cst {dimension_numbers = #tpu.dot_dimension_numbers<[1], [0], [0], [1], [0, 0, 1, 1], [], []>} : vector<16x128xf32>, vector<128x128xf32>, vector<16x128xf32> -> vector<16x128xf32>
    %c0_3 = arith.constant 0 : index
    %c0_4 = arith.constant 0 : index
    %3 = vector.load %arg3[%c0_3, %c0_4] : memref<1x128xf32, #tpu.memory_space<vmem>>, vector<1x128xf32>
    %4 = vector.broadcast %3 : vector<1x128xf32> to vector<16x128xf32>
    %5 = arith.addf %2, %4 : vector<16x128xf32>
    %cst_5 = arith.constant 0.000000e+00 : f32
    %6 = vector.broadcast %cst_5 : f32 to vector<16x128xf32>
    %7 = arith.maximumf %5, %6 : vector<16x128xf32>
    %c0_6 = arith.constant 0 : index
    %c0_7 = arith.constant 0 : index
    %8 = vector.load %arg4[%c0_6, %c0_7] : memref<128x128xf32, #tpu.memory_space<vmem>>, vector<128x128xf32>
    %cst_8 = arith.constant dense<0.000000e+00> : vector<16x128xf32>
    %9 = tpu.matmul %7, %8, %cst_8 {dimension_numbers = #tpu.dot_dimension_numbers<[1], [0], [0], [1], [0, 0, 1, 1], [], []>} : vector<16x128xf32>, vector<128x128xf32>, vector<16x128xf32> -> vector<16x128xf32>
    %c0_9 = arith.constant 0 : index
    %c0_10 = arith.constant 0 : index
    %10 = vector.load %arg5[%c0_9, %c0_10] : memref<1x128xf32, #tpu.memory_space<vmem>>, vector<1x128xf32>
    %11 = vector.broadcast %10 : vector<1x128xf32> to vector<16x128xf32>
    %12 = arith.addf %9, %11 : vector<16x128xf32>
    %c0_11 = arith.constant 0 : index
    %c0_12 = arith.constant 0 : index
    %13 = vector.load %arg6[%c0_11, %c0_12] : memref<16x128xf32, #tpu.memory_space<vmem>>, vector<16x128xf32>
    tpu.vector_store %arg6[%c0_11, %c0_12], %12 {strides = array<i32>} : memref<16x128xf32, #tpu.memory_space<vmem>>, vector<16x128xf32>,
    return
  }
  func.func @transform_0(%arg0: i32) -> (i32, i32) {
    %c0_i32 = arith.constant 0 : i32
    %c0_i32_0 = arith.constant 0 : i32
    return %arg0, %c0_i32 : i32, i32
  }
  func.func @transform_1(%arg0: i32) -> (i32, i32) {
    %c0_i32 = arith.constant 0 : i32
    %c0_i32_0 = arith.constant 0 : i32
    %c0_i32_1 = arith.constant 0 : i32
    return %c0_i32, %c0_i32_0 : i32, i32
  }
  func.func @transform_2(%arg0: i32) -> (i32, i32) {
    %c0_i32 = arith.constant 0 : i32
    %c0_i32_0 = arith.constant 0 : i32
    %c0_i32_1 = arith.constant 0 : i32
    return %c0_i32, %c0_i32_0 : i32, i32
  }
  func.func @transform_3(%arg0: i32) -> (i32, i32) {
    %c0_i32 = arith.constant 0 : i32
    %c0_i32_0 = arith.constant 0 : i32
    %c0_i32_1 = arith.constant 0 : i32
    return %c0_i32, %c0_i32_0 : i32, i32
  }
  func.func @transform_4(%arg0: i32) -> (i32, i32) {
    %c0_i32 = arith.constant 0 : i32
    %c0_i32_0 = arith.constant 0 : i32
    %c0_i32_1 = arith.constant 0 : i32
    return %c0_i32, %c0_i32_0 : i32, i32
  }
  func.func @transform_5(%arg0: i32) -> (i32, i32) {
    %c0_i32 = arith.constant 0 : i32
    %c0_i32_0 = arith.constant 0 : i32
    return %arg0, %c0_i32 : i32, i32
  }
}

</mosaic_0001>

<llo_original>
// kernel: tpu_custom_call.1
$region0: #{tpu_custom_call.1}
  #allocation0 [shape = 'u32[]', space=smem, size = 0x4, offset = 0x4, fixed_abs, tag = 'smem constant byte address 0x4 - core index']
  #allocation1 [shape = 'u32[144,128]{1,0:T(1,128)}', space=vmem, size = 0x12000, scoped, tag = 'internal scratch']
  %s0 = inlined_call_operand.hbm [shape: f32[16,128], index: 0, kind: input, shape index: {}]
  %s1 = inlined_call_operand.hbm [shape: f32[128,128], index: 1, kind: input, shape index: {}]
  %s2 = inlined_call_operand.vmem [shape: f32[1,128], index: 2, kind: input, shape index: {}]
  %s3 = inlined_call_operand.hbm [shape: f32[128,128], index: 3, kind: input, shape index: {}]
  %s4 = inlined_call_operand.vmem [shape: f32[1,128], index: 4, kind: input, shape index: {}]
  %s5 = inlined_call_operand.hbm [shape: f32[16,128], index: 5, kind: output, shape index: {}]
  %s6 = sld [smem:[#allocation0]]
  $region42: #{tpu_custom_call.1} parent=0
    _
  %s8 = ssub.s32 1, %s6
  %s9 = scalar_select 0, %s8, %s6
  $region1: #{tpu_custom_call.1} parent=0
    #allocation2 [shape = 'u8[8192]{0}', space=vmem, size = 0x2000, scoped, tag = 'input window, operand 0, single buffered']
    #allocation3 [shape = 's32[1]{0}', space=sflag, size = 0x4, scoped, tag = 'scoped memory for tpu_custom_call.1']
    #allocation4 [shape = 's32[1]{0}', space=sflag, size = 0x4, scoped, tag = 'scoped memory for tpu_custom_call.1']
    #allocation5 [shape = 'u8[65536]{0}', space=vmem, size = 0x10000, scoped, tag = 'input window, operand 1, single buffered']
    #allocation6 [shape = 's32[1]{0}', space=sflag, size = 0x4, scoped, tag = 'scoped memory for tpu_custom_call.1']
    #allocation7 [shape = 'u8[65536]{0}', space=vmem, size = 0x10000, scoped, tag = 'input window, operand 3, single buffered']
    #allocation8 [shape = 'u8[8192]{0}', space=vmem, size = 0x2000, scoped, tag = 'output window, operand 0, single buffered']
    %10 = vsyncpa [#allocation3], 0
    %11 = vsyncpa [#allocation6], 0
    %12 = vsyncpa [#allocation4], 0
    // Predicated region
    $region2: #{tpu_custom_call.1} parent=1 // pred_check
      _
    $region3: #{tpu_custom_call.1} parent=1 // pred_check_branch
      %14 = sbr.rel (0) target = $region5
    $region4: #{tpu_custom_call.1} parent=1 // pred_region
      %s16 = ssub.s32 256, 256
      %17 = vsyncadd [#allocation3], %s16
      %s18 = sshll.u32 [#allocation2], 4
      %s19 = int_to_ptr.vmem [resolvable:$true] %s18
      %24 = dma.hbm_to_vmem [thread:$0]  %s0, 256, %s19, [#allocation3], 128, 128, 8
    $region5: #{tpu_custom_call.1} parent=1 // pred_fallthru
      _
    // Predicated region
    $region6: #{tpu_custom_call.1} parent=1 // pred_check
      _
    $region7: #{tpu_custom_call.1} parent=1 // pred_check_branch
      %26 = sbr.rel (0) target = $region9
    $region8: #{tpu_custom_call.1} parent=1 // pred_region
      %s28 = ssub.s32 2048, 2048
      %29 = vsyncadd [#allocation6], %s28
      %s30 = sshll.u32 [#allocation5], 4
      %s31 = int_to_ptr.vmem [resolvable:$true] %s30
      %36 = dma.hbm_to_vmem [thread:$0]  %s1, 2048, %s31, [#allocation6], 128, 128, 8
    $region9: #{tpu_custom_call.1} parent=1 // pred_fallthru
      _
    // Predicated region
    $region10: #{tpu_custom_call.1} parent=1 // pred_check
      _
    $region11: #{tpu_custom_call.1} parent=1 // pred_check_branch
      %38 = sbr.rel (0) target = $region13
    $region12: #{tpu_custom_call.1} parent=1 // pred_region
      _
    $region13: #{tpu_custom_call.1} parent=1 // pred_fallthru
      _
    // Predicated region
    $region14: #{tpu_custom_call.1} parent=1 // pred_check
      _
    $region15: #{tpu_custom_call.1} parent=1 // pred_check_branch
      %40 = sbr.rel (0) target = $region17
    $region16: #{tpu_custom_call.1} parent=1 // pred_region
      %s42 = ssub.s32 2048, 2048
      %43 = vsyncadd [#allocation6], %s42
      %s44 = sshll.u32 [#allocation7], 4
      %s45 = int_to_ptr.vmem [resolvable:$true] %s44
      %50 = dma.hbm_to_vmem [thread:$0]  %s3, 2048, %s45, [#allocation6], 128, 128, 8
    $region17: #{tpu_custom_call.1} parent=1 // pred_fallthru
      _
    // Predicated region
    $region18: #{tpu_custom_call.1} parent=1 // pred_check
      _
    $region19: #{tpu_custom_call.1} parent=1 // pred_check_branch
      %52 = sbr.rel (0) target = $region21
    $region20: #{tpu_custom_call.1} parent=1 // pred_region
      _
    $region21: #{tpu_custom_call.1} parent=1 // pred_fallthru
      _
    // Predicated region
    $region22: #{tpu_custom_call.1} parent=1 // pred_check
      _
    $region23: #{tpu_custom_call.1} parent=1 // pred_check_branch
      %54 = sbr.rel (0) target = $region25
    $region24: #{tpu_custom_call.1} parent=1 // pred_region
      %55 = dma.done [#allocation3], 256
    $region25: #{tpu_custom_call.1} parent=1 // pred_fallthru
      _
    // Predicated region
    $region26: #{tpu_custom_call.1} parent=1 // pred_check
      _
    $region27: #{tpu_custom_call.1} parent=1 // pred_check_branch
      %57 = sbr.rel (0) target = $region29
    $region28: #{tpu_custom_call.1} parent=1 // pred_region
      %58 = dma.done [#allocation6], 2048
    $region29: #{tpu_custom_call.1} parent=1 // pred_fallthru
      _
    // Predicated region
    $region30: #{tpu_custom_call.1} parent=1 // pred_check
      _
    $region31: #{tpu_custom_call.1} parent=1 // pred_check_branch
      %60 = sbr.rel (0) target = $region33
    $region32: #{tpu_custom_call.1} parent=1 // pred_region
      %61 = dma.done [#allocation6], 2048
    $region33: #{tpu_custom_call.1} parent=1 // pred_fallthru
      _
    %v62 = vld [vmem:[#allocation2] sm:$0xff]
    %v63 = vld [vmem:[#allocation2 + $0x8] sm:$0xff]
    %v64 = vld [vmem:[#allocation5] sm:$0xff]
    %v65 = vld [vmem:[#allocation5 + $0x8] sm:$0xff]
    %v66 = vld [vmem:[#allocation5 + $0x10] sm:$0xff]
    %v67 = vld [vmem:[#allocation5 + $0x18] sm:$0xff]
    %v68 = vld [vmem:[#allocation5 + $0x20] sm:$0xff]
    %v69 = vld [vmem:[#allocation5 + $0x28] sm:$0xff]
    %v70 = vld [vmem:[#allocation5 + $0x30] sm:$0xff]
    %v71 = vld [vmem:[#allocation5 + $0x38] sm:$0xff]
    %v72 = vld [vmem:[#allocation5 + $0x40] sm:$0xff]
    %v73 = vld [vmem:[#allocation5 + $0x48] sm:$0xff]
    %v74 = vld [vmem:[#allocation5 + $0x50] sm:$0xff]
    %v75 = vld [vmem:[#allocation5 + $0x58] sm:$0xff]
    %v76 = vld [vmem:[#allocation5 + $0x60] sm:$0xff]
    %v77 = vld [vmem:[#allocation5 + $0x68] sm:$0xff]
    %v78 = vld [vmem:[#allocation5 + $0x70] sm:$0xff]
    %v79 = vld [vmem:[#allocation5 + $0x78] sm:$0xff]
    %v80 = vld [vmem:[%s2] sm:$0x1]
    %v82 = vlaneseq
    %v83 = vshrl.u32 %v82, 7
    %v84 = vsub.s32 0, %v83
    %v85 = vrot.slane %v80, %v84
    %87 = vmatprep.subr.mxu0 0.0
    %88 = vmatpush1.msra.mxu0 %v64
    %89 = vmatprep.subr.mxu0 0.0
    %90 = vmatpush1.msra.mxu0 %v65
    %91 = vmatprep.subr.mxu0 0.0
    %92 = vmatpush1.msra.mxu0 %v66
    %93 = vmatprep.subr.mxu0 0.0
    %94 = vmatpush1.msra.mxu0 %v67
    %95 = vmatprep.subr.mxu0 0.0
    %96 = vmatpush1.msra.mxu0 %v68
    %97 = vmatprep.subr.mxu0 0.0
    %98 = vmatpush1.msra.mxu0 %v69
    %99 = vmatprep.subr.mxu0 0.0
    %100 = vmatpush1.msra.mxu0 %v70
    %101 = vmatprep.subr.mxu0 0.0
    %102 = vmatpush1.msra.mxu0 %v71
    %103 = vmatprep.subr.mxu0 0.0
    %104 = vmatpush1.msra.mxu0 %v72
    %105 = vmatprep.subr.mxu0 0.0
    %106 = vmatpush1.msra.mxu0 %v73
    %107 = vmatprep.subr.mxu0 0.0
    %108 = vmatpush1.msra.mxu0 %v74
    %109 = vmatprep.subr.mxu0 0.0
    %110 = vmatpush1.msra.mxu0 %v75
    %111 = vmatprep.subr.mxu0 0.0
    %112 = vmatpush1.msra.mxu0 %v76
    %113 = vmatprep.subr.mxu0 0.0
    %114 = vmatpush1.msra.mxu0 %v77
    %115 = vmatprep.subr.mxu0 0.0
    %116 = vmatpush1.msra.mxu0 %v78
    %117 = vmatprep.subr.mxu0 0.0
    %118 = vmatpush1.msra.mxu0 %v79
    %119 = vmatprep.subr.mxu0 0.0
    %120 = vmatpush1.msra.mxu0 0.0
    %121 = vmatprep.subr.mxu0 0.0
    %122 = vmatpush1.msra.mxu0 0.0
    %123 = vmatprep.subr.mxu0 0.0
    %124 = vmatpush1.msra.mxu0 0.0
    %125 = vmatprep.subr.mxu0 0.0
    %126 = vmatpush1.msra.mxu0 0.0
    %127 = vmatprep.subr.mxu0 0.0
    %128 = vmatpush1.msra.mxu0 0.0
    %129 = vmatprep.subr.mxu0 0.0
    %130 = vmatpush1.msra.mxu0 0.0
    %131 = vmatprep.subr.mxu0 0.0
    %132 = vmatpush1.msra.mxu0 0.0
    %133 = vmatprep.subr.mxu0 0.0
    %134 = vmatpush1.msra.mxu0 0.0
    %135 = vmatprep.subr.mxu0 0.0
    %136 = vmatpush1.msra.mxu0 0.0
    %137 = vmatprep.subr.mxu0 0.0
    %138 = vmatpush1.msra.mxu0 0.0
    %139 = vmatprep.subr.mxu0 0.0
    %140 = vmatpush1.msra.mxu0 0.0
    %141 = vmatprep.subr.mxu0 0.0
    %142 = vmatpush1.msra.mxu0 0.0
    %143 = vmatprep.subr.mxu0 0.0
    %144 = vmatpush1.msra.mxu0 0.0
    %145 = vmatprep.subr.mxu0 0.0
    %146 = vmatpush1.msra.mxu0 0.0
    %147 = vmatprep.subr.mxu0 0.0
    %148 = vmatpush1.msra.mxu0 0.0
    %149 = vmatprep.subr.mxu0 0.0
    %150 = vmatpush1.msra.mxu0 0.0
    %151 = vmatprep.mubr.f32.mxu0 0.0
    %152 = vmatmul.mubr.f32.gmra.mrb[0].mxu0 %v62
    %v153 = vpop.f32.mrb[0].mxu0
    %v154 = vadd.f32 %v85, %v153
    %v155 = vpop.f32.mrb[0].mxu0
    %156 = vmatprep.mubr.f32.mxu0 0.0
    %157 = vmatmul.mubr.f32.gmra.mrb[0].mxu0 %v63
    %v158 = vpop.f32.mrb[0].mxu0
    %v159 = vadd.f32 %v85, %v158
    %v160 = vpop.f32.mrb[0].mxu0
    %161 = vdwg.mxu0
    %v162 = vmax.f32 %v154, 0.0
    %v163 = vmax.f32 %v159, 0.0
    %v164 = vld [vmem:[#allocation7] sm:$0xff]
    %v165 = vld [vmem:[#allocation7 + $0x8] sm:$0xff]
    %v166 = vld [vmem:[#allocation7 + $0x10] sm:$0xff]
    %v167 = vld [vmem:[#allocation7 + $0x18] sm:$0xff]
    %v168 = vld [vmem:[#allocation7 + $0x20] sm:$0xff]
    %v169 = vld [vmem:[#allocation7 + $0x28] sm:$0xff]
    %v170 = vld [vmem:[#allocation7 + $0x30] sm:$0xff]
    %v171 = vld [vmem:[#allocation7 + $0x38] sm:$0xff]
    %v172 = vld [vmem:[#allocation7 + $0x40] sm:$0xff]
    %v173 = vld [vmem:[#allocation7 + $0x48] sm:$0xff]
    %v174 = vld [vmem:[#allocation7 + $0x50] sm:$0xff]
    %v175 = vld [vmem:[#allocation7 + $0x58] sm:$0xff]
    %v176 = vld [vmem:[#allocation7 + $0x60] sm:$0xff]
    %v177 = vld [vmem:[#allocation7 + $0x68] sm:$0xff]
    %v178 = vld [vmem:[#allocation7 + $0x70] sm:$0xff]
    %v179 = vld [vmem:[#allocation7 + $0x78] sm:$0xff]
    %v180 = vld [vmem:[%s4] sm:$0x1]
    %v182 = vlaneseq
    %v183 = vshrl.u32 %v182, 7
    %v184 = vsub.s32 0, %v183
    %v185 = vrot.slane %v180, %v184
    %187 = vmatprep.subr.mxu0 0.0
    %188 = vmatpush1.msra.mxu0 %v164
    %189 = vmatprep.subr.mxu0 0.0
    %190 = vmatpush1.msra.mxu0 %v165
    %191 = vmatprep.subr.mxu0 0.0
    %192 = vmatpush1.msra.mxu0 %v166
    %193 = vmatprep.subr.mxu0 0.0
    %194 = vmatpush1.msra.mxu0 %v167
    %195 = vmatprep.subr.mxu0 0.0
    %196 = vmatpush1.msra.mxu0 %v168
    %197 = vmatprep.subr.mxu0 0.0
    %198 = vmatpush1.msra.mxu0 %v169
    %199 = vmatprep.subr.mxu0 0.0
    %200 = vmatpush1.msra.mxu0 %v170
    %201 = vmatprep.subr.mxu0 0.0
    %202 = vmatpush1.msra.mxu0 %v171
    %203 = vmatprep.subr.mxu0 0.0
    %204 = vmatpush1.msra.mxu0 %v172
    %205 = vmatprep.subr.mxu0 0.0
    %206 = vmatpush1.msra.mxu0 %v173
    %207 = vmatprep.subr.mxu0 0.0
    %208 = vmatpush1.msra.mxu0 %v174
    %209 = vmatprep.subr.mxu0 0.0
    %210 = vmatpush1.msra.mxu0 %v175
    %211 = vmatprep.subr.mxu0 0.0
    %212 = vmatpush1.msra.mxu0 %v176
    %213 = vmatprep.subr.mxu0 0.0
    %214 = vmatpush1.msra.mxu0 %v177
    %215 = vmatprep.subr.mxu0 0.0
    %216 = vmatpush1.msra.mxu0 %v178
    %217 = vmatprep.subr.mxu0 0.0
    %218 = vmatpush1.msra.mxu0 %v179
    %219 = vmatprep.subr.mxu0 0.0
    %220 = vmatpush1.msra.mxu0 0.0
    %221 = vmatprep.subr.mxu0 0.0
    %222 = vmatpush1.msra.mxu0 0.0
    %223 = vmatprep.subr.mxu0 0.0
    %224 = vmatpush1.msra.mxu0 0.0
    %225 = vmatprep.subr.mxu0 0.0
    %226 = vmatpush1.msra.mxu0 0.0
    %227 = vmatprep.subr.mxu0 0.0
    %228 = vmatpush1.msra.mxu0 0.0
    %229 = vmatprep.subr.mxu0 0.0
    %230 = vmatpush1.msra.mxu0 0.0
    %231 = vmatprep.subr.mxu0 0.0
    %232 = vmatpush1.msra.mxu0 0.0
    %233 = vmatprep.subr.mxu0 0.0
    %234 = vmatpush1.msra.mxu0 0.0
    %235 = vmatprep.subr.mxu0 0.0
    %236 = vmatpush1.msra.mxu0 0.0
    %237 = vmatprep.subr.mxu0 0.0
    %238 = vmatpush1.msra.mxu0 0.0
    %239 = vmatprep.subr.mxu0 0.0
    %240 = vmatpush1.msra.mxu0 0.0
    %241 = vmatprep.subr.mxu0 0.0
    %242 = vmatpush1.msra.mxu0 0.0
    %243 = vmatprep.subr.mxu0 0.0
    %244 = vmatpush1.msra.mxu0 0.0
    %245 = vmatprep.subr.mxu0 0.0
    %246 = vmatpush1.msra.mxu0 0.0
    %247 = vmatprep.subr.mxu0 0.0
    %248 = vmatpush1.msra.mxu0 0.0
    %249 = vmatprep.subr.mxu0 0.0
    %250 = vmatpush1.msra.mxu0 0.0
    %251 = vmatprep.mubr.f32.mxu0 0.0
    %252 = vmatmul.mubr.f32.gmra.mrb[0].mxu0 %v162
    %v253 = vpop.f32.mrb[0].mxu0
    %v254 = vadd.f32 %v185, %v253
    %v255 = vpop.f32.mrb[0].mxu0
    %256 = vmatprep.mubr.f32.mxu0 0.0
    %257 = vmatmul.mubr.f32.gmra.mrb[0].mxu0 %v163
    %v258 = vpop.f32.mrb[0].mxu0
    %v259 = vadd.f32 %v185, %v258
    %v260 = vpop.f32.mrb[0].mxu0
    %261 = vdwg.mxu0
    %262 = vst [vmem:[#allocation8] sm:$0xff] %v254
    %263 = vst [vmem:[#allocation8 + $0x8] sm:$0xff] %v259
    // Predicated region
    $region34: #{tpu_custom_call.1} parent=1 // pred_check
      _
    $region35: #{tpu_custom_call.1} parent=1 // pred_check_branch
      %265 = sbr.rel (0) target = $region37
    $region36: #{tpu_custom_call.1} parent=1 // pred_region
      %s267 = ssub.s32 256, 256
      %268 = vsyncadd [#allocation4], %s267
      %s269 = sshll.u32 [#allocation8], 4
      %s270 = int_to_ptr.vmem [resolvable:$true] %s269
      %275 = dma.vmem_to_hbm [thread:$0]  %s270, 256, %s5, [#allocation4], 128, 128, 8
    $region37: #{tpu_custom_call.1} parent=1 // pred_fallthru
      _
    // Predicated region
    $region38: #{tpu_custom_call.1} parent=1 // pred_check
      _
    $region39: #{tpu_custom_call.1} parent=1 // pred_check_branch
      %277 = sbr.rel (0) target = $region41
    $region40: #{tpu_custom_call.1} parent=1 // pred_region
      %278 = dma.done [#allocation4], 256
    $region41: #{tpu_custom_call.1} parent=1 // pred_fallthru
      _
    %279 = vsyncpa [#allocation3], 1
    %280 = vsyncpa [#allocation6], 1
    %281 = vsyncpa [#allocation4], 1

// kernel: tpu_custom_call.1
$region0: #{tpu_custom_call.1}
  #allocation0 [shape = 'u32[]', space=smem, size = 0x4, offset = 0x4, fixed_abs, tag = 'smem constant byte address 0x4 - core index']
  #allocation1 [shape = 'u32[144,128]{1,0:T(1,128)}', space=vmem, size = 0x12000, scoped, tag = 'internal scratch']
  %s0 = inlined_call_operand.hbm [shape: f32[16,128], index: 0, kind: input, shape index: {}]
  %s1 = inlined_call_operand.hbm [shape: f32[128,128], index: 1, kind: input, shape index: {}]
  %s2 = inlined_call_operand.vmem [shape: f32[1,128], index: 2, kind: input, shape index: {}]
  %s3 = inlined_call_operand.hbm [shape: f32[128,128], index: 3, kind: input, shape index: {}]
  %s4 = inlined_call_operand.vmem [shape: f32[1,128], index: 4, kind: input, shape index: {}]
  %s5 = inlined_call_operand.hbm [shape: f32[16,128], index: 5, kind: output, shape index: {}]
  %s6 = sld [smem:[#allocation0]]
  $region42: #{tpu_custom_call.1} parent=0
    _
  %s8 = ssub.s32 1, %s6
  %s9 = scalar_select 0, %s8, %s6
  $region1: #{tpu_custom_call.1} parent=0
    #allocation2 [shape = 'u8[8192]{0}', space=vmem, size = 0x2000, scoped, tag = 'input window, operand 0, single buffered']
    #allocation3 [shape = 's32[1]{0}', space=sflag, size = 0x4, scoped, tag = 'scoped memory for tpu_custom_call.1']
    #allocation4 [shape = 's32[1]{0}', space=sflag, size = 0x4, scoped, tag = 'scoped memory for tpu_custom_call.1']
    #allocation5 [shape = 'u8[65536]{0}', space=vmem, size = 0x10000, scoped, tag = 'input window, operand 1, single buffered']
    #allocation6 [shape = 's32[1]{0}', space=sflag, size = 0x4, scoped, tag = 'scoped memory for tpu_custom_call.1']
    #allocation7 [shape = 'u8[65536]{0}', space=vmem, size = 0x10000, scoped, tag = 'input window, operand 3, single buffered']
    #allocation8 [shape = 'u8[8192]{0}', space=vmem, size = 0x2000, scoped, tag = 'output window, operand 0, single buffered']
    %10 = vsyncpa [#allocation3], 0
    %11 = vsyncpa [#allocation6], 0
    %12 = vsyncpa [#allocation4], 0
    // Predicated region
    $region2: #{tpu_custom_call.1} parent=1 // pred_check
      _
    $region3: #{tpu_custom_call.1} parent=1 // pred_check_branch
      %14 = sbr.rel (0) target = $region5
    $region4: #{tpu_custom_call.1} parent=1 // pred_region
      %s16 = ssub.s32 256, 256
      %17 = vsyncadd [#allocation3], %s16
      %s18 = sshll.u32 [#allocation2], 4
      %s19 = int_to_ptr.vmem [resolvable:$true] %s18
      %24 = dma.hbm_to_vmem [thread:$0]  %s0, 256, %s19, [#allocation3], 128, 128, 8
    $region5: #{tpu_custom_call.1} parent=1 // pred_fallthru
      _
    // Predicated region
    $region6: #{tpu_custom_call.1} parent=1 // pred_check
      _
    $region7: #{tpu_custom_call.1} parent=1 // pred_check_branch
      %26 = sbr.rel (0) target = $region9
    $region8: #{tpu_custom_call.1} parent=1 // pred_region
      %s28 = ssub.s32 2048, 2048
      %29 = vsyncadd [#allocation6], %s28
      %s30 = sshll.u32 [#allocation5], 4
      %s31 = int_to_ptr.vmem [resolvable:$true] %s30
      %36 = dma.hbm_to_vmem [thread:$0]  %s1, 2048, %s31, [#allocation6], 128, 128, 8
    $region9: #{tpu_custom_call.1} parent=1 // pred_fallthru
      _
    // Predicated region
    $region10: #{tpu_custom_call.1} parent=1 // pred_check
      _
    $region11: #{tpu_custom_call.1} parent=1 // pred_check_branch
      %38 = sbr.rel (0) target = $region13
    $region12: #{tpu_custom_call.1} parent=1 // pred_region
      _
    $region13: #{tpu_custom_call.1} parent=1 // pred_fallthru
      _
    // Predicated region
    $region14: #{tpu_custom_call.1} parent=1 // pred_check
      _
    $region15: #{tpu_custom_call.1} parent=1 // pred_check_branch
      %40 = sbr.rel (0) target = $region17
    $region16: #{tpu_custom_call.1} parent=1 // pred_region
      %s42 = ssub.s32 2048, 2048
      %43 = vsyncadd [#allocation6], %s42
      %s44 = sshll.u32 [#allocation7], 4
      %s45 = int_to_ptr.vmem [resolvable:$true] %s44
      %50 = dma.hbm_to_vmem [thread:$0]  %s3, 2048, %s45, [#allocation6], 128, 128, 8
    $region17: #{tpu_custom_call.1} parent=1 // pred_fallthru
      _
    // Predicated region
    $region18: #{tpu_custom_call.1} parent=1 // pred_check
      _
    $region19: #{tpu_custom_call.1} parent=1 // pred_check_branch
      %52 = sbr.rel (0) target = $region21
    $region20: #{tpu_custom_call.1} parent=1 // pred_region
      _
    $region21: #{tpu_custom_call.1} parent=1 // pred_fallthru
      _
    // Predicated region
    $region22: #{tpu_custom_call.1} parent=1 // pred_check
      _
    $region23: #{tpu_custom_call.1} parent=1 // pred_check_branch
      %54 = sbr.rel (0) target = $region25
    $region24: #{tpu_custom_call.1} parent=1 // pred_region
      %55 = dma.done [#allocation3], 256
    $region25: #{tpu_custom_call.1} parent=1 // pred_fallthru
      _
    // Predicated region
    $region26: #{tpu_custom_call.1} parent=1 // pred_check
      _
    $region27: #{tpu_custom_call.1} parent=1 // pred_check_branch
      %57 = sbr.rel (0) target = $region29
    $region28: #{tpu_custom_call.1} parent=1 // pred_region
      %58 = dma.done [#allocation6], 2048
    $region29: #{tpu_custom_call.1} parent=1 // pred_fallthru
      _
    // Predicated region
    $region30: #{tpu_custom_call.1} parent=1 // pred_check
      _
    $region31: #{tpu_custom_call.1} parent=1 // pred_check_branch
      %60 = sbr.rel (0) target = $region33
    $region32: #{tpu_custom_call.1} parent=1 // pred_region
      %61 = dma.done [#allocation6], 2048
    $region33: #{tpu_custom_call.1} parent=1 // pred_fallthru
      _
    %v62 = vld [vmem:[#allocation2] sm:$0xff]
    %v63 = vld [vmem:[#allocation2 + $0x8] sm:$0xff]
    %v64 = vld [vmem:[#allocation5] sm:$0xff]
    %v65 = vld [vmem:[#allocation5 + $0x8] sm:$0xff]
    %v66 = vld [vmem:[#allocation5 + $0x10] sm:$0xff]
    %v67 = vld [vmem:[#allocation5 + $0x18] sm:$0xff]
    %v68 = vld [vmem:[#allocation5 + $0x20] sm:$0xff]
    %v69 = vld [vmem:[#allocation5 + $0x28] sm:$0xff]
    %v70 = vld [vmem:[#allocation5 + $0x30] sm:$0xff]
    %v71 = vld [vmem:[#allocation5 + $0x38] sm:$0xff]
    %v72 = vld [vmem:[#allocation5 + $0x40] sm:$0xff]
    %v73 = vld [vmem:[#allocation5 + $0x48] sm:$0xff]
    %v74 = vld [vmem:[#allocation5 + $0x50] sm:$0xff]
    %v75 = vld [vmem:[#allocation5 + $0x58] sm:$0xff]
    %v76 = vld [vmem:[#allocation5 + $0x60] sm:$0xff]
    %v77 = vld [vmem:[#allocation5 + $0x68] sm:$0xff]
    %v78 = vld [vmem:[#allocation5 + $0x70] sm:$0xff]
    %v79 = vld [vmem:[#allocation5 + $0x78] sm:$0xff]
    %v80 = vld [vmem:[%s2] sm:$0x1]
    %v82 = vlaneseq
    %v83 = vshrl.u32 %v82, 7
    %v84 = vsub.s32 0, %v83
    %v85 = vrot.slane %v80, %v84
    %87 = vmatprep.subr.mxu0 0.0
    %88 = vmatpush1.msra.mxu0 %v64
    %89 = vmatprep.subr.mxu0 0.0
    %90 = vmatpush1.msra.mxu0 %v65
    %91 = vmatprep.subr.mxu0 0.0
    %92 = vmatpush1.msra.mxu0 %v66
    %93 = vmatprep.subr.mxu0 0.0
    %94 = vmatpush1.msra.mxu0 %v67
    %95 = vmatprep.subr.mxu0 0.0
    %96 = vmatpush1.msra.mxu0 %v68
    %97 = vmatprep.subr.mxu0 0.0
    %98 = vmatpush1.msra.mxu0 %v69
    %99 = vmatprep.subr.mxu0 0.0
    %100 = vmatpush1.msra.mxu0 %v70
    %101 = vmatprep.subr.mxu0 0.0
    %102 = vmatpush1.msra.mxu0 %v71
    %103 = vmatprep.subr.mxu0 0.0
    %104 = vmatpush1.msra.mxu0 %v72
    %105 = vmatprep.subr.mxu0 0.0
    %106 = vmatpush1.msra.mxu0 %v73
    %107 = vmatprep.subr.mxu0 0.0
    %108 = vmatpush1.msra.mxu0 %v74
    %109 = vmatprep.subr.mxu0 0.0
    %110 = vmatpush1.msra.mxu0 %v75
    %111 = vmatprep.subr.mxu0 0.0
    %112 = vmatpush1.msra.mxu0 %v76
    %113 = vmatprep.subr.mxu0 0.0
    %114 = vmatpush1.msra.mxu0 %v77
    %115 = vmatprep.subr.mxu0 0.0
    %116 = vmatpush1.msra.mxu0 %v78
    %117 = vmatprep.subr.mxu0 0.0
    %118 = vmatpush1.msra.mxu0 %v79
    %119 = vmatprep.subr.mxu0 0.0
    %120 = vmatpush1.msra.mxu0 0.0
    %121 = vmatprep.subr.mxu0 0.0
    %122 = vmatpush1.msra.mxu0 0.0
    %123 = vmatprep.subr.mxu0 0.0
    %124 = vmatpush1.msra.mxu0 0.0
    %125 = vmatprep.subr.mxu0 0.0
    %126 = vmatpush1.msra.mxu0 0.0
    %127 = vmatprep.subr.mxu0 0.0
    %128 = vmatpush1.msra.mxu0 0.0
    %129 = vmatprep.subr.mxu0 0.0
    %130 = vmatpush1.msra.mxu0 0.0
    %131 = vmatprep.subr.mxu0 0.0
    %132 = vmatpush1.msra.mxu0 0.0
    %133 = vmatprep.subr.mxu0 0.0
    %134 = vmatpush1.msra.mxu0 0.0
    %135 = vmatprep.subr.mxu0 0.0
    %136 = vmatpush1.msra.mxu0 0.0
    %137 = vmatprep.subr.mxu0 0.0
    %138 = vmatpush1.msra.mxu0 0.0
    %139 = vmatprep.subr.mxu0 0.0
    %140 = vmatpush1.msra.mxu0 0.0
    %141 = vmatprep.subr.mxu0 0.0
    %142 = vmatpush1.msra.mxu0 0.0
    %143 = vmatprep.subr.mxu0 0.0
    %144 = vmatpush1.msra.mxu0 0.0
    %145 = vmatprep.subr.mxu0 0.0
    %146 = vmatpush1.msra.mxu0 0.0
    %147 = vmatprep.subr.mxu0 0.0
    %148 = vmatpush1.msra.mxu0 0.0
    %149 = vmatprep.subr.mxu0 0.0
    %150 = vmatpush1.msra.mxu0 0.0
    %151 = vmatprep.mubr.f32.mxu0 0.0
    %152 = vmatmul.mubr.f32.gmra.mrb[0].mxu0 %v62
    %v153 = vpop.f32.mrb[0].mxu0
    %v154 = vadd.f32 %v85, %v153
    %v155 = vpop.f32.mrb[0].mxu0
    %156 = vmatprep.mubr.f32.mxu0 0.0
    %157 = vmatmul.mubr.f32.gmra.mrb[0].mxu0 %v63
    %v158 = vpop.f32.mrb[0].mxu0
    %v159 = vadd.f32 %v85, %v158
    %v160 = vpop.f32.mrb[0].mxu0
    %161 = vdwg.mxu0
    %v162 = vmax.f32 %v154, 0.0
    %v163 = vmax.f32 %v159, 0.0
    %v164 = vld [vmem:[#allocation7] sm:$0xff]
    %v165 = vld [vmem:[#allocation7 + $0x8] sm:$0xff]
    %v166 = vld [vmem:[#allocation7 + $0x10] sm:$0xff]
    %v167 = vld [vmem:[#allocation7 + $0x18] sm:$0xff]
    %v168 = vld [vmem:[#allocation7 + $0x20] sm:$0xff]
    %v169 = vld [vmem:[#allocation7 + $0x28] sm:$0xff]
    %v170 = vld [vmem:[#allocation7 + $0x30] sm:$0xff]
    %v171 = vld [vmem:[#allocation7 + $0x38] sm:$0xff]
    %v172 = vld [vmem:[#allocation7 + $0x40] sm:$0xff]
    %v173 = vld [vmem:[#allocation7 + $0x48] sm:$0xff]
    %v174 = vld [vmem:[#allocation7 + $0x50] sm:$0xff]
    %v175 = vld [vmem:[#allocation7 + $0x58] sm:$0xff]
    %v176 = vld [vmem:[#allocation7 + $0x60] sm:$0xff]
    %v177 = vld [vmem:[#allocation7 + $0x68] sm:$0xff]
    %v178 = vld [vmem:[#allocation7 + $0x70] sm:$0xff]
    %v179 = vld [vmem:[#allocation7 + $0x78] sm:$0xff]
    %v180 = vld [vmem:[%s4] sm:$0x1]
    %v182 = vlaneseq
    %v183 = vshrl.u32 %v182, 7
    %v184 = vsub.s32 0, %v183
    %v185 = vrot.slane %v180, %v184
    %187 = vmatprep.subr.mxu0 0.0
    %188 = vmatpush1.msra.mxu0 %v164
    %189 = vmatprep.subr.mxu0 0.0
    %190 = vmatpush1.msra.mxu0 %v165
    %191 = vmatprep.subr.mxu0 0.0
    %192 = vmatpush1.msra.mxu0 %v166
    %193 = vmatprep.subr.mxu0 0.0
    %194 = vmatpush1.msra.mxu0 %v167
    %195 = vmatprep.subr.mxu0 0.0
    %196 = vmatpush1.msra.mxu0 %v168
    %197 = vmatprep.subr.mxu0 0.0
    %198 = vmatpush1.msra.mxu0 %v169
    %199 = vmatprep.subr.mxu0 0.0
    %200 = vmatpush1.msra.mxu0 %v170
    %201 = vmatprep.subr.mxu0 0.0
    %202 = vmatpush1.msra.mxu0 %v171
    %203 = vmatprep.subr.mxu0 0.0
    %204 = vmatpush1.msra.mxu0 %v172
    %205 = vmatprep.subr.mxu0 0.0
    %206 = vmatpush1.msra.mxu0 %v173
    %207 = vmatprep.subr.mxu0 0.0
    %208 = vmatpush1.msra.mxu0 %v174
    %209 = vmatprep.subr.mxu0 0.0
    %210 = vmatpush1.msra.mxu0 %v175
    %211 = vmatprep.subr.mxu0 0.0
    %212 = vmatpush1.msra.mxu0 %v176
    %213 = vmatprep.subr.mxu0 0.0
    %214 = vmatpush1.msra.mxu0 %v177
    %215 = vmatprep.subr.mxu0 0.0
    %216 = vmatpush1.msra.mxu0 %v178
    %217 = vmatprep.subr.mxu0 0.0
    %218 = vmatpush1.msra.mxu0 %v179
    %219 = vmatprep.subr.mxu0 0.0
    %220 = vmatpush1.msra.mxu0 0.0
    %221 = vmatprep.subr.mxu0 0.0
    %222 = vmatpush1.msra.mxu0 0.0
    %223 = vmatprep.subr.mxu0 0.0
    %224 = vmatpush1.msra.mxu0 0.0
    %225 = vmatprep.subr.mxu0 0.0
    %226 = vmatpush1.msra.mxu0 0.0
    %227 = vmatprep.subr.mxu0 0.0
    %228 = vmatpush1.msra.mxu0 0.0
    %229 = vmatprep.subr.mxu0 0.0
    %230 = vmatpush1.msra.mxu0 0.0
    %231 = vmatprep.subr.mxu0 0.0
    %232 = vmatpush1.msra.mxu0 0.0
    %233 = vmatprep.subr.mxu0 0.0
    %234 = vmatpush1.msra.mxu0 0.0
    %235 = vmatprep.subr.mxu0 0.0
    %236 = vmatpush1.msra.mxu0 0.0
    %237 = vmatprep.subr.mxu0 0.0
    %238 = vmatpush1.msra.mxu0 0.0
    %239 = vmatprep.subr.mxu0 0.0
    %240 = vmatpush1.msra.mxu0 0.0
    %241 = vmatprep.subr.mxu0 0.0
    %242 = vmatpush1.msra.mxu0 0.0
    %243 = vmatprep.subr.mxu0 0.0
    %244 = vmatpush1.msra.mxu0 0.0
    %245 = vmatprep.subr.mxu0 0.0
    %246 = vmatpush1.msra.mxu0 0.0
    %247 = vmatprep.subr.mxu0 0.0
    %248 = vmatpush1.msra.mxu0 0.0
    %249 = vmatprep.subr.mxu0 0.0
    %250 = vmatpush1.msra.mxu0 0.0
    %251 = vmatprep.mubr.f32.mxu0 0.0
    %252 = vmatmul.mubr.f32.gmra.mrb[0].mxu0 %v162
    %v253 = vpop.f32.mrb[0].mxu0
    %v254 = vadd.f32 %v185, %v253
    %v255 = vpop.f32.mrb[0].mxu0
    %256 = vmatprep.mubr.f32.mxu0 0.0
    %257 = vmatmul.mubr.f32.gmra.mrb[0].mxu0 %v163
    %v258 = vpop.f32.mrb[0].mxu0
    %v259 = vadd.f32 %v185, %v258
    %v260 = vpop.f32.mrb[0].mxu0
    %261 = vdwg.mxu0
    %262 = vst [vmem:[#allocation8] sm:$0xff] %v254
    %263 = vst [vmem:[#allocation8 + $0x8] sm:$0xff] %v259
    // Predicated region
    $region34: #{tpu_custom_call.1} parent=1 // pred_check
      _
    $region35: #{tpu_custom_call.1} parent=1 // pred_check_branch
      %265 = sbr.rel (0) target = $region37
    $region36: #{tpu_custom_call.1} parent=1 // pred_region
      %s267 = ssub.s32 256, 256
      %268 = vsyncadd [#allocation4], %s267
      %s269 = sshll.u32 [#allocation8], 4
      %s270 = int_to_ptr.vmem [resolvable:$true] %s269
      %275 = dma.vmem_to_hbm [thread:$0]  %s270, 256, %s5, [#allocation4], 128, 128, 8
    $region37: #{tpu_custom_call.1} parent=1 // pred_fallthru
      _
    // Predicated region
    $region38: #{tpu_custom_call.1} parent=1 // pred_check
      _
    $region39: #{tpu_custom_call.1} parent=1 // pred_check_branch
      %277 = sbr.rel (0) target = $region41
    $region40: #{tpu_custom_call.1} parent=1 // pred_region
      %278 = dma.done [#allocation4], 256
    $region41: #{tpu_custom_call.1} parent=1 // pred_fallthru
      _
    %279 = vsyncpa [#allocation3], 1
    %280 = vsyncpa [#allocation6], 1
    %281 = vsyncpa [#allocation4], 1

</llo_original>
